<compile_context>
chip_gen: v7x
topology: tpu7x:2x2x1
jax: 0.10.0
libtpu: 0.0.40
codegen_flags: <defaults>
</compile_context>

<pallas_src>
import functools

import jax
import jax.numpy as jnp
from jax.experimental import pallas as pl
from jax.experimental.pallas import tpu as pltpu

HIDDEN = 32   # nn.Linear(c, 32)
LANE = 128    # TPU lane width; output classes are padded up to this


def _round_up(x, m):
    return ((x + m - 1) // m) * m


def _fused_head_kernel(sid_ref, x_ref, w1_ref, b1_ref, w2_ref, b2_ref, o_ref):
    """relu(x @ W1 + b1) @ W2 + b2 on one row tile; weights chosen per scale."""
    del sid_ref                              # consumed by the index_maps only
    x = x_ref[...]                           # (TM, Cmax)
    w1 = w1_ref[0]                           # (Cmax, HIDDEN)
    b1 = b1_ref[0]                           # (1, HIDDEN)
    w2 = w2_ref[0]                           # (HIDDEN, Kpad)
    b2 = b2_ref[0]                           # (1, Kpad)

    h = jnp.dot(x, w1, preferred_element_type=jnp.float32) + b1
    h = jnp.maximum(h, 0.0)                  # ReLU(inplace=True) in torch
    out = jnp.dot(h.astype(w2.dtype), w2,
                  preferred_element_type=jnp.float32) + b2
    o_ref[...] = out.astype(o_ref.dtype)     # (TM, Kpad) full-lane store


@functools.partial(jax.jit, static_argnames=("tm",))
def _fused_mlp_heads(sid, x_cat, w1s, b1s, w2s, b2s, *, tm):
    n_tot, c_max = x_cat.shape
    k_pad = w2s.shape[-1]
    grid = (n_tot // tm,)
    return pl.pallas_call(
        _fused_head_kernel,
        out_shape=jax.ShapeDtypeStruct((n_tot, k_pad), x_cat.dtype),
        grid_spec=pltpu.PrefetchScalarGridSpec(
            num_scalar_prefetch=1,
            grid=grid,
            in_specs=[
                pl.BlockSpec((tm, c_max), lambda i, s: (i, 0)),              # x tile
                pl.BlockSpec((1, c_max, HIDDEN), lambda i, s: (s[i], 0, 0)),  # W1[s]
                pl.BlockSpec((1, 1, HIDDEN), lambda i, s: (s[i], 0, 0)),      # b1[s]
                pl.BlockSpec((1, HIDDEN, k_pad), lambda i, s: (s[i], 0, 0)),  # W2[s]
                pl.BlockSpec((1, 1, k_pad), lambda i, s: (s[i], 0, 0)),       # b2[s]
            ],
            out_specs=pl.BlockSpec((tm, k_pad), lambda i, s: (i, 0)),
        ),
        compiler_params=pltpu.CompilerParams(
            dimension_semantics=("parallel",)),
    )(sid, x_cat, w1s, b1s, w2s, b2s)


def point_train_head_forward(params, feats, *, tm=1024):
    """Forward: list of (N_i, C_i) point features -> list of (N_i, K) logits.

    params[i] = (w1 (C_i, 32), b1 (1, 32), w2 (32, K), b2 (1, K)),
    weights stored (in_features, out_features) so the kernel does x @ W + b.
    """
    assert len(params) == len(feats)
    c_max = max(w1.shape[0] for (w1, _, _, _) in params)
    k = params[0][2].shape[1]
    k_pad = _round_up(k, LANE)
    max_n = max(f.shape[0] for f in feats)
    tm = min(tm, _round_up(max_n, 8))        # multiple of 8 (f32 sublanes)

    # Stack per-scale weights (zero-pad C up to Cmax, K up to a full lane block).
    w1s, b1s, w2s, b2s = [], [], [], []
    for (w1, b1, w2, b2) in params:
        c = w1.shape[0]
        w1s.append(jnp.pad(w1, ((0, c_max - c), (0, 0))))
        b1s.append(b1.reshape(1, HIDDEN))
        w2s.append(jnp.pad(w2, ((0, 0), (0, k_pad - k))))
        b2s.append(jnp.pad(b2.reshape(1, k), ((0, 0), (0, k_pad - k))))
    w1s = jnp.stack(w1s)                     # (S, Cmax, HIDDEN)
    b1s = jnp.stack(b1s)                     # (S, 1, HIDDEN)
    w2s = jnp.stack(w2s)                     # (S, HIDDEN, Kpad)
    b2s = jnp.stack(b2s)                     # (S, 1, Kpad)

    # Row-pad each scale to a multiple of tm, concatenate, and build the per-tile
    # scale-id table consumed by the index_maps via scalar prefetch.
    x_parts, sid_parts, row_info = [], [], []
    offset = 0
    for s, feat in enumerate(feats):
        n, c = feat.shape
        n_pad = _round_up(n, tm)
        x_parts.append(jnp.pad(feat, ((0, n_pad - n), (0, c_max - c))))
        sid_parts.append(jnp.full((n_pad // tm,), s, dtype=jnp.int32))
        row_info.append((offset, n))
        offset += n_pad
    x_cat = jnp.concatenate(x_parts, axis=0)          # (N_tot_pad, Cmax)
    sid = jnp.concatenate(sid_parts, axis=0)          # (num_tiles,)

    out = _fused_mlp_heads(sid, x_cat, w1s, b1s, w2s, b2s, tm=tm)
    return [out[off:off + n, :k] for (off, n) in row_info]


def init_point_train_head(key, feature_channels, num_classes, dtype=jnp.float32):
    """Parameter init mirroring PointTrainHead.__init__ shapes (Uniform(-1/sqrt(fan_in)))."""
    params = []
    for c in feature_channels:
        key, k1, k2, k3, k4 = jax.random.split(key, 5)
        lim1 = 1.0 / jnp.sqrt(jnp.array(c, dtype=jnp.float32))
        lim2 = 1.0 / jnp.sqrt(jnp.array(HIDDEN, dtype=jnp.float32))
        w1 = jax.random.uniform(k1, (c, HIDDEN), dtype, -lim1, lim1)
        b1 = jax.random.uniform(k2, (1, HIDDEN), dtype, -lim1, lim1)
        w2 = jax.random.uniform(k3, (HIDDEN, num_classes), dtype, -lim2, lim2)
        b2 = jax.random.uniform(k4, (1, num_classes), dtype, -lim2, lim2)
        params.append((w1, b1, w2, b2))
    return params


def _reference_forward(params, feats):
    outs = []
    for (w1, b1, w2, b2), feat in zip(params, feats):
        h = jnp.maximum(feat @ w1 + b1, 0.0)
        outs.append(h @ w2 + b2)
    return outs


if __name__ == "__main__":
    key = jax.random.PRNGKey(0)

    feature_channels = [16, 32, 64]    # multi-scale point feature dims
    num_classes = 8
    n_points = [96, 128, 200]          # ragged point counts (exercise row padding)

    key, pkey = jax.random.split(key)
    params = init_point_train_head(pkey, feature_channels, num_classes)

    feats = []
    for c, n in zip(feature_channels, n_points):
        key, fkey = jax.random.split(key)
        feats.append(jax.random.normal(fkey, (n, c), dtype=jnp.float32))

    outs = point_train_head_forward(params, feats)
    outs = [jax.block_until_ready(o) for o in outs]

    refs = _reference_forward(params, feats)
    for o, r, n in zip(outs, refs, n_points):
        assert o.shape == (n, num_classes)
        assert jnp.allclose(o, r, atol=1e-4, rtol=1e-4), "mismatch vs reference"

    print("KERNEL_OK")
</pallas_src>

<mosaic_0001>
module attributes {stable_mosaic.version = 11 : i64} {
  func.func @_fused_head_kernel(%arg0: i32, %arg1: memref<3xi32, #tpu.memory_space<smem>>, %arg2: memref<200x64xf32, #tpu.memory_space<vmem>>, %arg3: memref<1x64x32xf32, #tpu.memory_space<vmem>>, %arg4: memref<1x1x32xf32, #tpu.memory_space<vmem>>, %arg5: memref<1x32x128xf32, #tpu.memory_space<vmem>>, %arg6: memref<1x1x128xf32, #tpu.memory_space<vmem>>, %arg7: memref<200x128xf32, #tpu.memory_space<vmem>>) attributes {dimension_semantics = [#tpu.dimension_semantics<parallel>], iteration_bounds = array<i64: 3>, scalar_prefetch = 1 : i64, scratch_operands = 0 : i64, tpu.core_type = #tpu.core_type<tc>, window_params = [{transform_indices = @transform_0, window_bounds = array<i64: 200, 64>}, {transform_indices = @transform_1, window_bounds = array<i64: 1, 64, 32>}, {transform_indices = @transform_2, window_bounds = array<i64: 1, 1, 32>}, {transform_indices = @transform_3, window_bounds = array<i64: 1, 32, 128>}, {transform_indices = @transform_4, window_bounds = array<i64: 1, 1, 128>}, {transform_indices = @transform_5, window_bounds = array<i64: 200, 128>}]} {
    %c0 = arith.constant 0 : index
    %c0_0 = arith.constant 0 : index
    %0 = vector.load %arg2[%c0, %c0_0] : memref<200x64xf32, #tpu.memory_space<vmem>>, vector<200x64xf32>
    %c0_1 = arith.constant 0 : index
    %c0_2 = arith.constant 0 : index
    %c0_3 = arith.constant 0 : index
    %1 = vector.load %arg3[%c0_1, %c0_2, %c0_3] : memref<1x64x32xf32, #tpu.memory_space<vmem>>, vector<1x64x32xf32>
    %2 = vector.shape_cast %1 : vector<1x64x32xf32> to vector<64x32xf32>
    %c0_4 = arith.constant 0 : index
    %c0_5 = arith.constant 0 : index
    %c0_6 = arith.constant 0 : index
    %3 = vector.load %arg4[%c0_4, %c0_5, %c0_6] : memref<1x1x32xf32, #tpu.memory_space<vmem>>, vector<1x1x32xf32>
    %4 = vector.shape_cast %3 : vector<1x1x32xf32> to vector<1x32xf32>
    %c0_7 = arith.constant 0 : index
    %c0_8 = arith.constant 0 : index
    %c0_9 = arith.constant 0 : index
    %5 = vector.load %arg5[%c0_7, %c0_8, %c0_9] : memref<1x32x128xf32, #tpu.memory_space<vmem>>, vector<1x32x128xf32>
    %6 = vector.shape_cast %5 : vector<1x32x128xf32> to vector<32x128xf32>
    %c0_10 = arith.constant 0 : index
    %c0_11 = arith.constant 0 : index
    %c0_12 = arith.constant 0 : index
    %7 = vector.load %arg6[%c0_10, %c0_11, %c0_12] : memref<1x1x128xf32, #tpu.memory_space<vmem>>, vector<1x1x128xf32>
    %8 = vector.shape_cast %7 : vector<1x1x128xf32> to vector<1x128xf32>
    %cst = arith.constant dense<0.000000e+00> : vector<200x32xf32>
    %9 = tpu.matmul %0, %2, %cst {dimension_numbers = #tpu.dot_dimension_numbers<[1], [0], [0], [1], [0, 0, 1, 1], [], []>} : vector<200x64xf32>, vector<64x32xf32>, vector<200x32xf32> -> vector<200x32xf32>
    %10 = vector.broadcast %4 : vector<1x32xf32> to vector<200x32xf32>
    %11 = arith.addf %9, %10 : vector<200x32xf32>
    %cst_13 = arith.constant 0.000000e+00 : f32
    %12 = vector.broadcast %cst_13 : f32 to vector<200x32xf32>
    %13 = arith.maximumf %11, %12 : vector<200x32xf32>
    %cst_14 = arith.constant dense<0.000000e+00> : vector<200x128xf32>
    %14 = tpu.matmul %13, %6, %cst_14 {dimension_numbers = #tpu.dot_dimension_numbers<[1], [0], [0], [1], [0, 0, 1, 1], [], []>} : vector<200x32xf32>, vector<32x128xf32>, vector<200x128xf32> -> vector<200x128xf32>
    %15 = vector.broadcast %8 : vector<1x128xf32> to vector<200x128xf32>
    %16 = arith.addf %14, %15 : vector<200x128xf32>
    %c0_15 = arith.constant 0 : index
    %c0_16 = arith.constant 0 : index
    %17 = vector.load %arg7[%c0_15, %c0_16] : memref<200x128xf32, #tpu.memory_space<vmem>>, vector<200x128xf32>
    tpu.vector_store %arg7[%c0_15, %c0_16], %16 {strides = array<i32>} : memref<200x128xf32, #tpu.memory_space<vmem>>, vector<200x128xf32>,
    return
  }
  func.func @transform_0(%arg0: i32, %arg1: memref<3xi32, #tpu.memory_space<smem>>) -> (i32, i32) {
    %c0_i32 = arith.constant 0 : i32
    %c0_i32_0 = arith.constant 0 : i32
    return %arg0, %c0_i32 : i32, i32
  }
  func.func @transform_1(%arg0: i32, %arg1: memref<3xi32, #tpu.memory_space<smem>>) -> (i32, i32, i32) {
    %0 = arith.index_cast %arg0 : i32 to index
    %1 = memref.load %arg1[%0] : memref<3xi32, #tpu.memory_space<smem>>
    %c0_i32 = arith.constant 0 : i32
    %c0_i32_0 = arith.constant 0 : i32
    %c0_i32_1 = arith.constant 0 : i32
    return %1, %c0_i32, %c0_i32_0 : i32, i32, i32
  }
  func.func @transform_2(%arg0: i32, %arg1: memref<3xi32, #tpu.memory_space<smem>>) -> (i32, i32, i32) {
    %0 = arith.index_cast %arg0 : i32 to index
    %1 = memref.load %arg1[%0] : memref<3xi32, #tpu.memory_space<smem>>
    %c0_i32 = arith.constant 0 : i32
    %c0_i32_0 = arith.constant 0 : i32
    %c0_i32_1 = arith.constant 0 : i32
    return %1, %c0_i32, %c0_i32_0 : i32, i32, i32
  }
  func.func @transform_3(%arg0: i32, %arg1: memref<3xi32, #tpu.memory_space<smem>>) -> (i32, i32, i32) {
    %0 = arith.index_cast %arg0 : i32 to index
    %1 = memref.load %arg1[%0] : memref<3xi32, #tpu.memory_space<smem>>
    %c0_i32 = arith.constant 0 : i32
    %c0_i32_0 = arith.constant 0 : i32
    %c0_i32_1 = arith.constant 0 : i32
    return %1, %c0_i32, %c0_i32_0 : i32, i32, i32
  }
  func.func @transform_4(%arg0: i32, %arg1: memref<3xi32, #tpu.memory_space<smem>>) -> (i32, i32, i32) {
    %0 = arith.index_cast %arg0 : i32 to index
    %1 = memref.load %arg1[%0] : memref<3xi32, #tpu.memory_space<smem>>
    %c0_i32 = arith.constant 0 : i32
    %c0_i32_0 = arith.constant 0 : i32
    %c0_i32_1 = arith.constant 0 : i32
    return %1, %c0_i32, %c0_i32_0 : i32, i32, i32
  }
  func.func @transform_5(%arg0: i32, %arg1: memref<3xi32, #tpu.memory_space<smem>>) -> (i32, i32) {
    %c0_i32 = arith.constant 0 : i32
    %c0_i32_0 = arith.constant 0 : i32
    return %arg0, %c0_i32 : i32, i32
  }
}

</mosaic_0001>

<llo_original>
// kernel: _fused_mlp_heads.1
$region0: #{_fused_mlp_heads.1}
  #allocation0 [shape = 'u32[]', space=smem, size = 0x4, offset = 0x4, fixed_abs, tag = 'smem constant byte address 0x4 - core index']
  #allocation1 [shape = 'u32[144,128]{1,0:T(1,128)}', space=vmem, size = 0x12000, scoped, tag = 'internal scratch']
  #allocation2 [shape = 's32[1]{0}', space=sflag, size = 0x4, scoped, tag = 'scoped memory for _fused_mlp_heads.1']
  #allocation3 [shape = 'u8[512]{0}', space=smem, size = 0x200, scoped, tag = 'prefetched SMEM operand 0']
  %s0 = inlined_call_operand.vmem [shape: s32[3], index: 0, kind: input, shape index: {}]
  %s1 = inlined_call_operand.vmem [shape: f32[600,64], index: 1, kind: input, shape index: {}]
  %s2 = inlined_call_operand.vmem [shape: f32[3,64,32], index: 2, kind: input, shape index: {}]
  %s3 = inlined_call_operand.vmem [shape: f32[3,1,32], index: 3, kind: input, shape index: {}]
  %s4 = inlined_call_operand.vmem [shape: f32[3,32,128], index: 4, kind: input, shape index: {}]
  %s5 = inlined_call_operand.vmem [shape: f32[3,1,128], index: 5, kind: input, shape index: {}]
  %s6 = inlined_call_operand.hbm [shape: f32[600,128], index: 6, kind: output, shape index: {}]
  %s7 = sld [smem:[#allocation0]]
  $region53: #{_fused_mlp_heads.1} parent=0
    _
  %s9 = ssub.s32 1, %s7
  %s10 = scalar_select 0, %s9, %s7
  %s11 = sshll.u32 %s0, 4
  %s12 = int_to_ptr.vmem [resolvable:$true] %s11
  %14 = dma.vmem_to_smem %s12, 16, [#allocation3], [#allocation2]
  %15 = dma.done [#allocation2], 16
  %16 = sfence
  $region1: #{_fused_mlp_heads.1} parent=0
    #allocation4 [shape = 'u8[204800]{0}', space=vmem, size = 0x32000, scoped, tag = 'output window, operand 0']
    #allocation5 [shape = 's32[2]{0}', space=sflag, size = 0x8, scoped, tag = 'scoped memory for _fused_mlp_heads.1']
    %17 = vsyncpa [#allocation5], 0
    %s18 = scalar_lea.sflag [#allocation5], 1
    %19 = vsyncpa %s18, 0
    loop: start=0, step=1, limit=5
    $region2: #{_fused_mlp_heads.1} parent=1 // loop_pre_header
      _
    $region3: #{_fused_mlp_heads.1} parent=1 // loop_header
      %s21 = sphi 0, %s25
      %p22 = scmp.ge.s32.totalorder %s21, 5
      %s31 = sphi 0, %s33
      %s34 = sphi 0, %s31
      %s35 = sphi 0, %s34
      %s51 = sphi 0, %s35
      %s59 = sphi 0, %s61
      %s62 = sphi 0, %s59
      %s63 = sphi 0, %s62
      %s79 = sphi 0, %s63
      %s87 = sphi 0, %s89
      %s90 = sphi 0, %s87
      %s91 = sphi 0, %s90
      %s107 = sphi 0, %s91
      %s115 = sphi 0, %s117
      %s118 = sphi 0, %s115
      %s119 = sphi 0, %s118
      %s135 = sphi 0, %s119
      %s143 = sphi 0, %s145
      %s146 = sphi 0, %s143
      %s147 = sphi 0, %s146
      %s163 = sphi 0, %s147
      %s169 = sphi 0, %s171
      %s172 = sphi 0, %s169
      %s173 = sphi 0, %s172
      %s189 = sphi 0, %s173
    $region4: #{_fused_mlp_heads.1} parent=1 // loop_header_branch
      %24 = sbr.rel (%p22) target = $region8
    $region5: #{_fused_mlp_heads.1} parent=1 // loop_body
      %s26 = ssub.s32 %s21, 1
      %s27 = ssub.s32 %s21, 2
      %s28 = sadd.s32 %s21, 1
      %s29 = ssub.s32 %s21, %s28
      %p30 = scmp.eq.s32.totalorder %s29, 0
      %s32 = sadd.s32 %s31, 1
      %s33 = scalar_select %p30, %s31, %s32
      %p36 = pneg %p30
      %p37 = scmp.eq.s32.totalorder %s21, 2
      %p38 = por %p36, %p37
      %p39 = scmp.ne.s32.totalorder %s31, %s34
      %p40 = scmp.eq.s32.totalorder %s21, 0
      %p41 = por %p39, %p40
      %p42 = scmp.ne.s32.totalorder %s31, %s34
      %p43 = scmp.eq.s32.totalorder %s26, 2
      %p44 = por %p42, %p43
      %p45 = scmp.ne.s32.totalorder %s34, %s35
      %p46 = scmp.eq.s32.totalorder %s26, 0
      %p47 = por %p45, %p46
      %p48 = scmp.ne.s32.totalorder %s34, %s35
      %p49 = scmp.eq.s32.totalorder %s27, 2
      %p50 = por %p48, %p49
      %p52 = scmp.ne.s32.totalorder %s35, %s51
      %p53 = scmp.eq.s32.totalorder %s27, 0
      %p54 = por %p52, %p53
      %s55 = sld [smem:[#allocation3 + %s21]]
      %s56 = sld [smem:[#allocation3 + %s28]]
      %s57 = ssub.s32 %s55, %s56
      %p58 = scmp.eq.s32.totalorder %s57, 0
      %s60 = sadd.s32 %s59, 1
      %s61 = scalar_select %p58, %s59, %s60
      %p64 = pneg %p58
      %p65 = scmp.eq.s32.totalorder %s21, 2
      %p66 = por %p64, %p65
      %p67 = scmp.ne.s32.totalorder %s59, %s62
      %p68 = scmp.eq.s32.totalorder %s21, 0
      %p69 = por %p67, %p68
      %p70 = scmp.ne.s32.totalorder %s59, %s62
      %p71 = scmp.eq.s32.totalorder %s26, 2
      %p72 = por %p70, %p71
      %p73 = scmp.ne.s32.totalorder %s62, %s63
      %p74 = scmp.eq.s32.totalorder %s26, 0
      %p75 = por %p73, %p74
      %p76 = scmp.ne.s32.totalorder %s62, %s63
      %p77 = scmp.eq.s32.totalorder %s27, 2
      %p78 = por %p76, %p77
      %p80 = scmp.ne.s32.totalorder %s63, %s79
      %p81 = scmp.eq.s32.totalorder %s27, 0
      %p82 = por %p80, %p81
      %s83 = sld [smem:[#allocation3 + %s21]]
      %s84 = sld [smem:[#allocation3 + %s28]]
      %s85 = ssub.s32 %s83, %s84
      %p86 = scmp.eq.s32.totalorder %s85, 0
      %s88 = sadd.s32 %s87, 1
      %s89 = scalar_select %p86, %s87, %s88
      %p92 = pneg %p86
      %p93 = scmp.eq.s32.totalorder %s21, 2
      %p94 = por %p92, %p93
      %p95 = scmp.ne.s32.totalorder %s87, %s90
      %p96 = scmp.eq.s32.totalorder %s21, 0
      %p97 = por %p95, %p96
      %p98 = scmp.ne.s32.totalorder %s87, %s90
      %p99 = scmp.eq.s32.totalorder %s26, 2
      %p100 = por %p98, %p99
      %p101 = scmp.ne.s32.totalorder %s90, %s91
      %p102 = scmp.eq.s32.totalorder %s26, 0
      %p103 = por %p101, %p102
      %p104 = scmp.ne.s32.totalorder %s90, %s91
      %p105 = scmp.eq.s32.totalorder %s27, 2
      %p106 = por %p104, %p105
      %p108 = scmp.ne.s32.totalorder %s91, %s107
      %p109 = scmp.eq.s32.totalorder %s27, 0
      %p110 = por %p108, %p109
      %s111 = sld [smem:[#allocation3 + %s21]]
      %s112 = sld [smem:[#allocation3 + %s28]]
      %s113 = ssub.s32 %s111, %s112
      %p114 = scmp.eq.s32.totalorder %s113, 0
      %s116 = sadd.s32 %s115, 1
      %s117 = scalar_select %p114, %s115, %s116
      %p120 = pneg %p114
      %p121 = scmp.eq.s32.totalorder %s21, 2
      %p122 = por %p120, %p121
      %p123 = scmp.ne.s32.totalorder %s115, %s118
      %p124 = scmp.eq.s32.totalorder %s21, 0
      %p125 = por %p123, %p124
      %p126 = scmp.ne.s32.totalorder %s115, %s118
      %p127 = scmp.eq.s32.totalorder %s26, 2
      %p128 = por %p126, %p127
      %p129 = scmp.ne.s32.totalorder %s118, %s119
      %p130 = scmp.eq.s32.totalorder %s26, 0
      %p131 = por %p129, %p130
      %p132 = scmp.ne.s32.totalorder %s118, %s119
      %p133 = scmp.eq.s32.totalorder %s27, 2
      %p134 = por %p132, %p133
      %p136 = scmp.ne.s32.totalorder %s119, %s135
      %p137 = scmp.eq.s32.totalorder %s27, 0
      %p138 = por %p136, %p137
      %s139 = sld [smem:[#allocation3 + %s21]]
      %s140 = sld [smem:[#allocation3 + %s28]]
      %s141 = ssub.s32 %s139, %s140
      %p142 = scmp.eq.s32.totalorder %s141, 0
      %s144 = sadd.s32 %s143, 1
      %s145 = scalar_select %p142, %s143, %s144
      %p148 = pneg %p142
      %p149 = scmp.eq.s32.totalorder %s21, 2
      %p150 = por %p148, %p149
      %p151 = scmp.ne.s32.totalorder %s143, %s146
      %p152 = scmp.eq.s32.totalorder %s21, 0
      %p153 = por %p151, %p152
      %p154 = scmp.ne.s32.totalorder %s143, %s146
      %p155 = scmp.eq.s32.totalorder %s26, 2
      %p156 = por %p154, %p155
      %p157 = scmp.ne.s32.totalorder %s146, %s147
      %p158 = scmp.eq.s32.totalorder %s26, 0
      %p159 = por %p157, %p158
      %p160 = scmp.ne.s32.totalorder %s146, %s147
      %p161 = scmp.eq.s32.totalorder %s27, 2
      %p162 = por %p160, %p161
      %p164 = scmp.ne.s32.totalorder %s147, %s163
      %p165 = scmp.eq.s32.totalorder %s27, 0
      %p166 = por %p164, %p165
      %s167 = ssub.s32 %s21, %s28
      %p168 = scmp.eq.s32.totalorder %s167, 0
      %s170 = sadd.s32 %s169, 1
      %s171 = scalar_select %p168, %s169, %s170
      %p174 = pneg %p168
      %p175 = scmp.eq.s32.totalorder %s21, 2
      %p176 = por %p174, %p175
      %p177 = scmp.ne.s32.totalorder %s169, %s172
      %p178 = scmp.eq.s32.totalorder %s21, 0
      %p179 = por %p177, %p178
      %p180 = scmp.ne.s32.totalorder %s169, %s172
      %p181 = scmp.eq.s32.totalorder %s26, 2
      %p182 = por %p180, %p181
      %p183 = scmp.ne.s32.totalorder %s172, %s173
      %p184 = scmp.eq.s32.totalorder %s26, 0
      %p185 = por %p183, %p184
      %p186 = scmp.ne.s32.totalorder %s172, %s173
      %p187 = scmp.eq.s32.totalorder %s27, 2
      %p188 = por %p186, %p187
      %p190 = scmp.ne.s32.totalorder %s173, %s189
      %p191 = scmp.eq.s32.totalorder %s27, 0
      %p192 = por %p190, %p191
      %p193 = scmp.le.s32.totalorder 1, %s21
      %p194 = scmp.lt.s32.totalorder %s21, 4
      %p195 = pnand %p193, %p194
      %p196 = pneg %p195
      // Predicated region
      $region9: #{_fused_mlp_heads.1} parent=5 // pred_check
        _
      $region10: #{_fused_mlp_heads.1} parent=5 // pred_check_branch
        %198 = sbr.rel (%p195) target = $region12
      $region11: #{_fused_mlp_heads.1} parent=5 // pred_region
        %s199 = ssub.s32 %s21, 1
      $region12: #{_fused_mlp_heads.1} parent=5 // pred_fallthru
        _
      %p200 = scmp.lt.s32.totalorder %s21, 3
      // Predicated region
      $region13: #{_fused_mlp_heads.1} parent=5 // pred_check
        %p201 = pneg %p200
      $region14: #{_fused_mlp_heads.1} parent=5 // pred_check_branch
        %203 = sbr.rel (%p201) target = $region16
      $region15: #{_fused_mlp_heads.1} parent=5 // pred_region
        // Predicated region
        $region17: #{_fused_mlp_heads.1} parent=15 // pred_check
          %p204 = pneg %p41
        $region18: #{_fused_mlp_heads.1} parent=15 // pred_check_branch
          %206 = sbr.rel (%p204) target = $region20
        $region19: #{_fused_mlp_heads.1} parent=15 // pred_region
          %s207 = smul.u32 25, %s21
          %p208 = scmp.lt.s32.totalorder %s207, 74
          %s209 = scalar_select %p208, %s207, 74
          %s210 = smul.addr %s209, 8
          %s211 = scalar_lea.vmem %s1, %s210
          %s212 = smul.u32 25, %s21
        $region20: #{_fused_mlp_heads.1} parent=15 // pred_fallthru
          _
        // Predicated region
        $region21: #{_fused_mlp_heads.1} parent=15 // pred_check
          %p213 = pneg %p69
        $region22: #{_fused_mlp_heads.1} parent=15 // pred_check_branch
          %215 = sbr.rel (%p213) target = $region24
        $region23: #{_fused_mlp_heads.1} parent=15 // pred_region
          %s216 = sld [smem:[#allocation3 + %s21]]
          %p217 = scmp.lt.s32.totalorder %s216, 2
          %s218 = scalar_select %p217, %s216, 2
          %s219 = smul.addr %s218, 8
          %s220 = smul.addr %s219, 8
          %s221 = scalar_lea.vmem %s2, %s220
          %s222 = sld [smem:[#allocation3 + %s21]]
        $region24: #{_fused_mlp_heads.1} parent=15 // pred_fallthru
          _
        // Predicated region
        $region25: #{_fused_mlp_heads.1} parent=15 // pred_check
          %p223 = pneg %p97
        $region26: #{_fused_mlp_heads.1} parent=15 // pred_check_branch
          %225 = sbr.rel (%p223) target = $region28
        $region27: #{_fused_mlp_heads.1} parent=15 // pred_region
          %s226 = sld [smem:[#allocation3 + %s21]]
          %p227 = scmp.lt.s32.totalorder %s226, 2
          %s228 = scalar_select %p227, %s226, 2
          %s229 = scalar_lea.vmem %s3, %s228
          %s230 = sld [smem:[#allocation3 + %s21]]
        $region28: #{_fused_mlp_heads.1} parent=15 // pred_fallthru
          _
        // Predicated region
        $region29: #{_fused_mlp_heads.1} parent=15 // pred_check
          %p231 = pneg %p125
        $region30: #{_fused_mlp_heads.1} parent=15 // pred_check_branch
          %233 = sbr.rel (%p231) target = $region32
        $region31: #{_fused_mlp_heads.1} parent=15 // pred_region
          %s234 = sld [smem:[#allocation3 + %s21]]
          %p235 = scmp.lt.s32.totalorder %s234, 2
          %s236 = scalar_select %p235, %s234, 2
          %s237 = smul.addr %s236, 4
          %s238 = smul.addr %s237, 8
          %s239 = scalar_lea.vmem %s4, %s238
          %s240 = sld [smem:[#allocation3 + %s21]]
        $region32: #{_fused_mlp_heads.1} parent=15 // pred_fallthru
          _
        // Predicated region
        $region33: #{_fused_mlp_heads.1} parent=15 // pred_check
          %p241 = pneg %p153
        $region34: #{_fused_mlp_heads.1} parent=15 // pred_check_branch
          %243 = sbr.rel (%p241) target = $region36
        $region35: #{_fused_mlp_heads.1} parent=15 // pred_region
          %s244 = sld [smem:[#allocation3 + %s21]]
          %p245 = scmp.lt.s32.totalorder %s244, 2
          %s246 = scalar_select %p245, %s244, 2
          %s247 = scalar_lea.vmem %s5, %s246
          %s248 = sld [smem:[#allocation3 + %s21]]
        $region36: #{_fused_mlp_heads.1} parent=15 // pred_fallthru
          _
      $region16: #{_fused_mlp_heads.1} parent=5 // pred_fallthru
        _
      %p249 = scmp.le.s32.totalorder 1, %s21
      %p250 = scmp.lt.s32.totalorder %s21, 4
      %p251 = pnand %p249, %p250
      %p252 = pneg %p251
      // Predicated region
      $region37: #{_fused_mlp_heads.1} parent=5 // pred_check
        _
      $region38: #{_fused_mlp_heads.1} parent=5 // pred_check_branch
        %254 = sbr.rel (%p251) target = $region40
      $region39: #{_fused_mlp_heads.1} parent=5 // pred_region
        %s255 = ssub.s32 %s21, 1
        %s256 = smul.u32 25, %s26
        %p257 = scmp.lt.s32.totalorder %s256, 74
        %s258 = scalar_select %p257, %s256, 74
        %s259 = smul.addr %s258, 8
        %s260 = scalar_lea.vmem %s1, %s259
        %p261 = pneg %p47
        %p262 = pneg %p44
        %s263 = sld [smem:[#allocation3 + %s26]]
        %p264 = scmp.lt.s32.totalorder %s263, 2
        %s265 = scalar_select %p264, %s263, 2
        %s266 = smul.addr %s265, 8
        %s267 = smul.addr %s266, 8
        %s268 = scalar_lea.vmem %s2, %s267
        %p269 = pneg %p75
        %p270 = pneg %p72
        %s271 = sld [smem:[#allocation3 + %s26]]
        %p272 = scmp.lt.s32.totalorder %s271, 2
        %s273 = scalar_select %p272, %s271, 2
        %s274 = scalar_lea.vmem %s3, %s273
        %p275 = pneg %p103
        %p276 = pneg %p100
        %s277 = sld [smem:[#allocation3 + %s26]]
        %p278 = scmp.lt.s32.totalorder %s277, 2
        %s279 = scalar_select %p278, %s277, 2
        %s280 = smul.addr %s279, 4
        %s281 = smul.addr %s280, 8
        %s282 = scalar_lea.vmem %s4, %s281
        %p283 = pneg %p131
        %p284 = pneg %p128
        %s285 = sld [smem:[#allocation3 + %s26]]
        %p286 = scmp.lt.s32.totalorder %s285, 2
        %s287 = scalar_select %p286, %s285, 2
        %s288 = scalar_lea.vmem %s5, %s287
        %p289 = pneg %p159
        %p290 = pneg %p156
        %p291 = pneg %p185
        %p292 = pneg %p182
        %s293 = sand.u32 %s172, 1
        %s294 = scalar_lea.sflag [#allocation5], %s293
        %s295 = sand.u32 %s172, 1
        %s296 = smul.addr %s295, 200
        %s297 = scalar_lea.vmem [#allocation4], %s296
        %s298 = smul.u32 25, %s26
        %p299 = scmp.lt.s32.totalorder %s298, 74
        %s300 = scalar_select %p299, %s298, 74
        %s301 = smul.addr %s300, 8
        %s302 = scalar_lea.vmem %s1, %s301
        %s303 = smul.u32 25, %s26
        %s304 = sld [smem:[#allocation3 + %s26]]
        %p305 = scmp.lt.s32.totalorder %s304, 2
        %s306 = scalar_select %p305, %s304, 2
        %s307 = smul.addr %s306, 8
        %s308 = smul.addr %s307, 8
        %s309 = scalar_lea.vmem %s2, %s308
        %s310 = sld [smem:[#allocation3 + %s26]]
        %s311 = sld [smem:[#allocation3 + %s26]]
        %p312 = scmp.lt.s32.totalorder %s311, 2
        %s313 = scalar_select %p312, %s311, 2
        %s314 = scalar_lea.vmem %s3, %s313
        %s315 = sld [smem:[#allocation3 + %s26]]
        %s316 = sld [smem:[#allocation3 + %s26]]
        %p317 = scmp.lt.s32.totalorder %s316, 2
        %s318 = scalar_select %p317, %s316, 2
        %s319 = smul.addr %s318, 4
        %s320 = smul.addr %s319, 8
        %s321 = scalar_lea.vmem %s4, %s320
        %s322 = sld [smem:[#allocation3 + %s26]]
        %s323 = sld [smem:[#allocation3 + %s26]]
        %p324 = scmp.lt.s32.totalorder %s323, 2
        %s325 = scalar_select %p324, %s323, 2
        %s326 = scalar_lea.vmem %s5, %s325
        %s327 = sld [smem:[#allocation3 + %s26]]
        %s328 = smul.u32 25, %s26
        %v329 = vld [vmem:[%s302] sm:$0xff]
        %v330 = vld [vmem:[%s302 + $0x8] sm:$0xff]
        %v331 = vld [vmem:[%s302 + $0x10] sm:$0xff]
        %v332 = vld [vmem:[%s302 + $0x18] sm:$0xff]
        %v333 = vld [vmem:[%s302 + $0x20] sm:$0xff]
        %v334 = vld [vmem:[%s302 + $0x28] sm:$0xff]
        %v335 = vld [vmem:[%s302 + $0x30] sm:$0xff]
        %v336 = vld [vmem:[%s302 + $0x38] sm:$0xff]
        %v337 = vld [vmem:[%s302 + $0x40] sm:$0xff]
        %v338 = vld [vmem:[%s302 + $0x48] sm:$0xff]
        %v339 = vld [vmem:[%s302 + $0x50] sm:$0xff]
        %v340 = vld [vmem:[%s302 + $0x58] sm:$0xff]
        %v341 = vld [vmem:[%s302 + $0x60] sm:$0xff]
        %v342 = vld [vmem:[%s302 + $0x68] sm:$0xff]
        %v343 = vld [vmem:[%s302 + $0x70] sm:$0xff]
        %v344 = vld [vmem:[%s302 + $0x78] sm:$0xff]
        %v345 = vld [vmem:[%s302 + $0x80] sm:$0xff]
        %v346 = vld [vmem:[%s302 + $0x88] sm:$0xff]
        %v347 = vld [vmem:[%s302 + $0x90] sm:$0xff]
        %v348 = vld [vmem:[%s302 + $0x98] sm:$0xff]
        %v349 = vld [vmem:[%s302 + $0xa0] sm:$0xff]
        %v350 = vld [vmem:[%s302 + $0xa8] sm:$0xff]
        %v351 = vld [vmem:[%s302 + $0xb0] sm:$0xff]
        %v352 = vld [vmem:[%s302 + $0xb8] sm:$0xff]
        %v353 = vld [vmem:[%s302 + $0xc0] sm:$0xff]
        %v354 = vld [vmem:[%s309] sm:$0xff]
        %v355 = vld [vmem:[%s309 + $0x8] sm:$0xff]
        %v356 = vld [vmem:[%s309 + $0x10] sm:$0xff]
        %v357 = vld [vmem:[%s309 + $0x18] sm:$0xff]
        %v358 = vld [vmem:[%s309 + $0x20] sm:$0xff]
        %v359 = vld [vmem:[%s309 + $0x28] sm:$0xff]
        %v360 = vld [vmem:[%s309 + $0x30] sm:$0xff]
        %v361 = vld [vmem:[%s309 + $0x38] sm:$0xff]
        %v362 = vld [vmem:[%s314] sm:$0x1]
        %v363 = vld [vmem:[%s321] sm:$0xff]
        %v364 = vld [vmem:[%s321 + $0x8] sm:$0xff]
        %v365 = vld [vmem:[%s321 + $0x10] sm:$0xff]
        %v366 = vld [vmem:[%s321 + $0x18] sm:$0xff]
        %v367 = vld [vmem:[%s326] sm:$0x1]
        %v369 = vlaneseq
        %v370 = vshrl.u32 %v369, 7
        %v371 = vsub.s32 0, %v370
        %v372 = vrot.slane %v362, %v371
        %vm374 = vcmask 523264
        %v376 = vsel %vm374, %v329, 0
        %v379 = vsel %vm374, %v330, 0
        %v382 = vsel %vm374, %v331, 0
        %v385 = vsel %vm374, %v332, 0
        %v388 = vsel %vm374, %v333, 0
        %v391 = vsel %vm374, %v334, 0
        %v394 = vsel %vm374, %v335, 0
        %v397 = vsel %vm374, %v336, 0
        %v400 = vsel %vm374, %v337, 0
        %v403 = vsel %vm374, %v338, 0
        %v406 = vsel %vm374, %v339, 0
        %v409 = vsel %vm374, %v340, 0
        %v412 = vsel %vm374, %v341, 0
        %v415 = vsel %vm374, %v342, 0
        %v418 = vsel %vm374, %v343, 0
        %v421 = vsel %vm374, %v344, 0
        %v424 = vsel %vm374, %v345, 0
        %v427 = vsel %vm374, %v346, 0
        %v430 = vsel %vm374, %v347, 0
        %v433 = vsel %vm374, %v348, 0
        %v436 = vsel %vm374, %v349, 0
        %v439 = vsel %vm374, %v350, 0
        %v442 = vsel %vm374, %v351, 0
        %v445 = vsel %vm374, %v352, 0
        %v448 = vsel %vm374, %v353, 0
        %450 = vmatprep.subr.mxu0 0.0
        %451 = vmatpush1.msra.mxu0 %v354
        %452 = vmatprep.subr.mxu0 0.0
        %453 = vmatpush1.msra.mxu0 %v355
        %454 = vmatprep.subr.mxu0 0.0
        %455 = vmatpush1.msra.mxu0 %v356
        %456 = vmatprep.subr.mxu0 0.0
        %457 = vmatpush1.msra.mxu0 %v357
        %458 = vmatprep.subr.mxu0 0.0
        %459 = vmatpush1.msra.mxu0 %v358
        %460 = vmatprep.subr.mxu0 0.0
        %461 = vmatpush1.msra.mxu0 %v359
        %462 = vmatprep.subr.mxu0 0.0
        %463 = vmatpush1.msra.mxu0 %v360
        %464 = vmatprep.subr.mxu0 0.0
        %465 = vmatpush1.msra.mxu0 %v361
        %466 = vmatprep.subr.mxu0 0.0
        %467 = vmatpush1.msra.mxu0 0.0
        %468 = vmatprep.subr.mxu0 0.0
        %469 = vmatpush1.msra.mxu0 0.0
        %470 = vmatprep.subr.mxu0 0.0
        %471 = vmatpush1.msra.mxu0 0.0
        %472 = vmatprep.subr.mxu0 0.0
        %473 = vmatpush1.msra.mxu0 0.0
        %474 = vmatprep.subr.mxu0 0.0
        %475 = vmatpush1.msra.mxu0 0.0
        %476 = vmatprep.subr.mxu0 0.0
        %477 = vmatpush1.msra.mxu0 0.0
        %478 = vmatprep.subr.mxu0 0.0
        %479 = vmatpush1.msra.mxu0 0.0
        %480 = vmatprep.subr.mxu0 0.0
        %481 = vmatpush1.msra.mxu0 0.0
        %482 = vmatprep.subr.mxu0 0.0
        %483 = vmatpush1.msra.mxu0 0.0
        %484 = vmatprep.subr.mxu0 0.0
        %485 = vmatpush1.msra.mxu0 0.0
        %486 = vmatprep.subr.mxu0 0.0
        %487 = vmatpush1.msra.mxu0 0.0
        %488 = vmatprep.subr.mxu0 0.0
        %489 = vmatpush1.msra.mxu0 0.0
        %490 = vmatprep.subr.mxu0 0.0
        %491 = vmatpush1.msra.mxu0 0.0
        %492 = vmatprep.subr.mxu0 0.0
        %493 = vmatpush1.msra.mxu0 0.0
        %494 = vmatprep.subr.mxu0 0.0
        %495 = vmatpush1.msra.mxu0 0.0
        %496 = vmatprep.subr.mxu0 0.0
        %497 = vmatpush1.msra.mxu0 0.0
        %498 = vmatprep.subr.mxu0 0.0
        %499 = vmatpush1.msra.mxu0 0.0
        %500 = vmatprep.subr.mxu0 0.0
        %501 = vmatpush1.msra.mxu0 0.0
        %502 = vmatprep.subr.mxu0 0.0
        %503 = vmatpush1.msra.mxu0 0.0
        %504 = vmatprep.subr.mxu0 0.0
        %505 = vmatpush1.msra.mxu0 0.0
        %506 = vmatprep.subr.mxu0 0.0
        %507 = vmatpush1.msra.mxu0 0.0
        %508 = vmatprep.subr.mxu0 0.0
        %509 = vmatpush1.msra.mxu0 0.0
        %510 = vmatprep.subr.mxu0 0.0
        %511 = vmatpush1.msra.mxu0 0.0
        %512 = vmatprep.subr.mxu0 0.0
        %513 = vmatpush1.msra.mxu0 0.0
        %514 = vmatprep.mubr.f32.mxu0 0.0
        %515 = vmatmul.mubr.f32.gmra.mrb[0].mxu0 %v376
        %v516 = vpop.f32.mrb[0].mxu0
        %v517 = vadd.f32 %v372, %v516
        %v518 = vpop.f32.mrb[0].mxu0
        %519 = vmatprep.mubr.f32.mxu0 0.0
        %520 = vmatmul.mubr.f32.gmra.mrb[0].mxu0 %v379
        %v521 = vpop.f32.mrb[0].mxu0
        %v522 = vadd.f32 %v372, %v521
        %v523 = vpop.f32.mrb[0].mxu0
        %524 = vmatprep.mubr.f32.mxu0 0.0
        %525 = vmatmul.mubr.f32.gmra.mrb[0].mxu0 %v382
        %v526 = vpop.f32.mrb[0].mxu0
        %v527 = vadd.f32 %v372, %v526
        %v528 = vpop.f32.mrb[0].mxu0
        %529 = vmatprep.mubr.f32.mxu0 0.0
        %530 = vmatmul.mubr.f32.gmra.mrb[0].mxu0 %v385
        %v531 = vpop.f32.mrb[0].mxu0
        %v532 = vadd.f32 %v372, %v531
        %v533 = vpop.f32.mrb[0].mxu0
        %534 = vmatprep.mubr.f32.mxu0 0.0
        %535 = vmatmul.mubr.f32.gmra.mrb[0].mxu0 %v388
        %v536 = vpop.f32.mrb[0].mxu0
        %v537 = vadd.f32 %v372, %v536
        %v538 = vpop.f32.mrb[0].mxu0
        %539 = vmatprep.mubr.f32.mxu0 0.0
        %540 = vmatmul.mubr.f32.gmra.mrb[0].mxu0 %v391
        %v541 = vpop.f32.mrb[0].mxu0
        %v542 = vadd.f32 %v372, %v541
        %v543 = vpop.f32.mrb[0].mxu0
        %544 = vmatprep.mubr.f32.mxu0 0.0
        %545 = vmatmul.mubr.f32.gmra.mrb[0].mxu0 %v394
        %v546 = vpop.f32.mrb[0].mxu0
        %v547 = vadd.f32 %v372, %v546
        %v548 = vpop.f32.mrb[0].mxu0
        %549 = vmatprep.mubr.f32.mxu0 0.0
        %550 = vmatmul.mubr.f32.gmra.mrb[0].mxu0 %v397
        %v551 = vpop.f32.mrb[0].mxu0
        %v552 = vadd.f32 %v372, %v551
        %v553 = vpop.f32.mrb[0].mxu0
        %554 = vmatprep.mubr.f32.mxu0 0.0
        %555 = vmatmul.mubr.f32.gmra.mrb[0].mxu0 %v400
        %v556 = vpop.f32.mrb[0].mxu0
        %v557 = vadd.f32 %v372, %v556
        %v558 = vpop.f32.mrb[0].mxu0
        %559 = vmatprep.mubr.f32.mxu0 0.0
        %560 = vmatmul.mubr.f32.gmra.mrb[0].mxu0 %v403
        %v561 = vpop.f32.mrb[0].mxu0
        %v562 = vadd.f32 %v372, %v561
        %v563 = vpop.f32.mrb[0].mxu0
        %564 = vmatprep.mubr.f32.mxu0 0.0
        %565 = vmatmul.mubr.f32.gmra.mrb[0].mxu0 %v406
        %v566 = vpop.f32.mrb[0].mxu0
        %v567 = vadd.f32 %v372, %v566
        %v568 = vpop.f32.mrb[0].mxu0
        %569 = vmatprep.mubr.f32.mxu0 0.0
        %570 = vmatmul.mubr.f32.gmra.mrb[0].mxu0 %v409
        %v571 = vpop.f32.mrb[0].mxu0
        %v572 = vadd.f32 %v372, %v571
        %v573 = vpop.f32.mrb[0].mxu0
        %574 = vmatprep.mubr.f32.mxu0 0.0
        %575 = vmatmul.mubr.f32.gmra.mrb[0].mxu0 %v412
        %v576 = vpop.f32.mrb[0].mxu0
        %v577 = vadd.f32 %v372, %v576
        %v578 = vpop.f32.mrb[0].mxu0
        %579 = vmatprep.mubr.f32.mxu0 0.0
        %580 = vmatmul.mubr.f32.gmra.mrb[0].mxu0 %v415
        %v581 = vpop.f32.mrb[0].mxu0
        %v582 = vadd.f32 %v372, %v581
        %v583 = vpop.f32.mrb[0].mxu0
        %584 = vmatprep.mubr.f32.mxu0 0.0
        %585 = vmatmul.mubr.f32.gmra.mrb[0].mxu0 %v418
        %v586 = vpop.f32.mrb[0].mxu0
        %v587 = vadd.f32 %v372, %v586
        %v588 = vpop.f32.mrb[0].mxu0
        %589 = vmatprep.mubr.f32.mxu0 0.0
        %590 = vmatmul.mubr.f32.gmra.mrb[0].mxu0 %v421
        %v591 = vpop.f32.mrb[0].mxu0
        %v592 = vadd.f32 %v372, %v591
        %v593 = vpop.f32.mrb[0].mxu0
        %594 = vmatprep.mubr.f32.mxu0 0.0
        %595 = vmatmul.mubr.f32.gmra.mrb[0].mxu0 %v424
        %v596 = vpop.f32.mrb[0].mxu0
        %v597 = vadd.f32 %v372, %v596
        %v598 = vpop.f32.mrb[0].mxu0
        %599 = vmatprep.mubr.f32.mxu0 0.0
        %600 = vmatmul.mubr.f32.gmra.mrb[0].mxu0 %v427
        %v601 = vpop.f32.mrb[0].mxu0
        %v602 = vadd.f32 %v372, %v601
        %v603 = vpop.f32.mrb[0].mxu0
        %604 = vmatprep.mubr.f32.mxu0 0.0
        %605 = vmatmul.mubr.f32.gmra.mrb[0].mxu0 %v430
        %v606 = vpop.f32.mrb[0].mxu0
        %v607 = vadd.f32 %v372, %v606
        %v608 = vpop.f32.mrb[0].mxu0
        %609 = vmatprep.mubr.f32.mxu0 0.0
        %610 = vmatmul.mubr.f32.gmra.mrb[0].mxu0 %v433
        %v611 = vpop.f32.mrb[0].mxu0
        %v612 = vadd.f32 %v372, %v611
        %v613 = vpop.f32.mrb[0].mxu0
        %614 = vmatprep.mubr.f32.mxu0 0.0
        %615 = vmatmul.mubr.f32.gmra.mrb[0].mxu0 %v436
        %v616 = vpop.f32.mrb[0].mxu0
        %v617 = vadd.f32 %v372, %v616
        %v618 = vpop.f32.mrb[0].mxu0
        %619 = vmatprep.mubr.f32.mxu0 0.0
        %620 = vmatmul.mubr.f32.gmra.mrb[0].mxu0 %v439
        %v621 = vpop.f32.mrb[0].mxu0
        %v622 = vadd.f32 %v372, %v621
        %v623 = vpop.f32.mrb[0].mxu0
        %624 = vmatprep.mubr.f32.mxu0 0.0
        %625 = vmatmul.mubr.f32.gmra.mrb[0].mxu0 %v442
        %v626 = vpop.f32.mrb[0].mxu0
        %v627 = vadd.f32 %v372, %v626
        %v628 = vpop.f32.mrb[0].mxu0
        %629 = vmatprep.mubr.f32.mxu0 0.0
        %630 = vmatmul.mubr.f32.gmra.mrb[0].mxu0 %v445
        %v631 = vpop.f32.mrb[0].mxu0
        %v632 = vadd.f32 %v372, %v631
        %v633 = vpop.f32.mrb[0].mxu0
        %634 = vmatprep.mubr.f32.mxu0 0.0
        %635 = vmatmul.mubr.f32.gmra.mrb[0].mxu0 %v448
        %v636 = vpop.f32.mrb[0].mxu0
        %v637 = vadd.f32 %v372, %v636
        %v638 = vpop.f32.mrb[0].mxu0
        %639 = vdwg.mxu0
        %v640 = vmax.f32 %v517, 0.0
        %v641 = vmax.f32 %v522, 0.0
        %v642 = vmax.f32 %v527, 0.0
        %v643 = vmax.f32 %v532, 0.0
        %v644 = vmax.f32 %v537, 0.0
        %v645 = vmax.f32 %v542, 0.0
        %v646 = vmax.f32 %v547, 0.0
        %v647 = vmax.f32 %v552, 0.0
        %v648 = vmax.f32 %v557, 0.0
        %v649 = vmax.f32 %v562, 0.0
        %v650 = vmax.f32 %v567, 0.0
        %v651 = vmax.f32 %v572, 0.0
        %v652 = vmax.f32 %v577, 0.0
        %v653 = vmax.f32 %v582, 0.0
        %v654 = vmax.f32 %v587, 0.0
        %v655 = vmax.f32 %v592, 0.0
        %v656 = vmax.f32 %v597, 0.0
        %v657 = vmax.f32 %v602, 0.0
        %v658 = vmax.f32 %v607, 0.0
        %v659 = vmax.f32 %v612, 0.0
        %v660 = vmax.f32 %v617, 0.0
        %v661 = vmax.f32 %v622, 0.0
        %v662 = vmax.f32 %v627, 0.0
        %v663 = vmax.f32 %v632, 0.0
        %v664 = vmax.f32 %v637, 0.0
        %v666 = vlaneseq
        %v667 = vshrl.u32 %v666, 7
        %v668 = vsub.s32 0, %v667
        %v669 = vrot.slane %v367, %v668
        %vm671 = vcmask 261120
        %v673 = vsel %vm671, %v640, 0
        %v676 = vsel %vm671, %v641, 0
        %v679 = vsel %vm671, %v642, 0
        %v682 = vsel %vm671, %v643, 0
        %v685 = vsel %vm671, %v644, 0
        %v688 = vsel %vm671, %v645, 0
        %v691 = vsel %vm671, %v646, 0
        %v694 = vsel %vm671, %v647, 0
        %v697 = vsel %vm671, %v648, 0
        %v700 = vsel %vm671, %v649, 0
        %v703 = vsel %vm671, %v650, 0
        %v706 = vsel %vm671, %v651, 0
        %v709 = vsel %vm671, %v652, 0
        %v712 = vsel %vm671, %v653, 0
        %v715 = vsel %vm671, %v654, 0
        %v718 = vsel %vm671, %v655, 0
        %v721 = vsel %vm671, %v656, 0
        %v724 = vsel %vm671, %v657, 0
        %v727 = vsel %vm671, %v658, 0
        %v730 = vsel %vm671, %v659, 0
        %v733 = vsel %vm671, %v660, 0
        %v736 = vsel %vm671, %v661, 0
        %v739 = vsel %vm671, %v662, 0
        %v742 = vsel %vm671, %v663, 0
        %v745 = vsel %vm671, %v664, 0
        %747 = vmatprep.subr.mxu0 0.0
        %748 = vmatpush1.msra.mxu0 %v363
        %749 = vmatprep.subr.mxu0 0.0
        %750 = vmatpush1.msra.mxu0 %v364
        %751 = vmatprep.subr.mxu0 0.0
        %752 = vmatpush1.msra.mxu0 %v365
        %753 = vmatprep.subr.mxu0 0.0
        %754 = vmatpush1.msra.mxu0 %v366
        %755 = vmatprep.subr.mxu0 0.0
        %756 = vmatpush1.msra.mxu0 0.0
        %757 = vmatprep.subr.mxu0 0.0
        %758 = vmatpush1.msra.mxu0 0.0
        %759 = vmatprep.subr.mxu0 0.0
        %760 = vmatpush1.msra.mxu0 0.0
        %761 = vmatprep.subr.mxu0 0.0
        %762 = vmatpush1.msra.mxu0 0.0
        %763 = vmatprep.subr.mxu0 0.0
        %764 = vmatpush1.msra.mxu0 0.0
        %765 = vmatprep.subr.mxu0 0.0
        %766 = vmatpush1.msra.mxu0 0.0
        %767 = vmatprep.subr.mxu0 0.0
        %768 = vmatpush1.msra.mxu0 0.0
        %769 = vmatprep.subr.mxu0 0.0
        %770 = vmatpush1.msra.mxu0 0.0
        %771 = vmatprep.subr.mxu0 0.0
        %772 = vmatpush1.msra.mxu0 0.0
        %773 = vmatprep.subr.mxu0 0.0
        %774 = vmatpush1.msra.mxu0 0.0
        %775 = vmatprep.subr.mxu0 0.0
        %776 = vmatpush1.msra.mxu0 0.0
        %777 = vmatprep.subr.mxu0 0.0
        %778 = vmatpush1.msra.mxu0 0.0
        %779 = vmatprep.subr.mxu0 0.0
        %780 = vmatpush1.msra.mxu0 0.0
        %781 = vmatprep.subr.mxu0 0.0
        %782 = vmatpush1.msra.mxu0 0.0
        %783 = vmatprep.subr.mxu0 0.0
        %784 = vmatpush1.msra.mxu0 0.0
        %785 = vmatprep.subr.mxu0 0.0
        %786 = vmatpush1.msra.mxu0 0.0
        %787 = vmatprep.subr.mxu0 0.0
        %788 = vmatpush1.msra.mxu0 0.0
        %789 = vmatprep.subr.mxu0 0.0
        %790 = vmatpush1.msra.mxu0 0.0
        %791 = vmatprep.subr.mxu0 0.0
        %792 = vmatpush1.msra.mxu0 0.0
        %793 = vmatprep.subr.mxu0 0.0
        %794 = vmatpush1.msra.mxu0 0.0
        %795 = vmatprep.subr.mxu0 0.0
        %796 = vmatpush1.msra.mxu0 0.0
        %797 = vmatprep.subr.mxu0 0.0
        %798 = vmatpush1.msra.mxu0 0.0
        %799 = vmatprep.subr.mxu0 0.0
        %800 = vmatpush1.msra.mxu0 0.0
        %801 = vmatprep.subr.mxu0 0.0
        %802 = vmatpush1.msra.mxu0 0.0
        %803 = vmatprep.subr.mxu0 0.0
        %804 = vmatpush1.msra.mxu0 0.0
        %805 = vmatprep.subr.mxu0 0.0
        %806 = vmatpush1.msra.mxu0 0.0
        %807 = vmatprep.subr.mxu0 0.0
        %808 = vmatpush1.msra.mxu0 0.0
        %809 = vmatprep.subr.mxu0 0.0
        %810 = vmatpush1.msra.mxu0 0.0
        %811 = vmatprep.mubr.f32.mxu0 0.0
        %812 = vmatmul.mubr.f32.gmra.mrb[0].mxu0 %v673
        %v813 = vpop.f32.mrb[0].mxu0
        %v814 = vadd.f32 %v669, %v813
        %v815 = vpop.f32.mrb[0].mxu0
        %816 = vmatprep.mubr.f32.mxu0 0.0
        %817 = vmatmul.mubr.f32.gmra.mrb[0].mxu0 %v676
        %v818 = vpop.f32.mrb[0].mxu0
        %v819 = vadd.f32 %v669, %v818
        %v820 = vpop.f32.mrb[0].mxu0
        %821 = vmatprep.mubr.f32.mxu0 0.0
        %822 = vmatmul.mubr.f32.gmra.mrb[0].mxu0 %v679
        %v823 = vpop.f32.mrb[0].mxu0
        %v824 = vadd.f32 %v669, %v823
        %v825 = vpop.f32.mrb[0].mxu0
        %826 = vmatprep.mubr.f32.mxu0 0.0
        %827 = vmatmul.mubr.f32.gmra.mrb[0].mxu0 %v682
        %v828 = vpop.f32.mrb[0].mxu0
        %v829 = vadd.f32 %v669, %v828
        %v830 = vpop.f32.mrb[0].mxu0
        %831 = vmatprep.mubr.f32.mxu0 0.0
        %832 = vmatmul.mubr.f32.gmra.mrb[0].mxu0 %v685
        %v833 = vpop.f32.mrb[0].mxu0
        %v834 = vadd.f32 %v669, %v833
        %v835 = vpop.f32.mrb[0].mxu0
        %836 = vmatprep.mubr.f32.mxu0 0.0
        %837 = vmatmul.mubr.f32.gmra.mrb[0].mxu0 %v688
        %v838 = vpop.f32.mrb[0].mxu0
        %v839 = vadd.f32 %v669, %v838
        %v840 = vpop.f32.mrb[0].mxu0
        %841 = vmatprep.mubr.f32.mxu0 0.0
        %842 = vmatmul.mubr.f32.gmra.mrb[0].mxu0 %v691
        %v843 = vpop.f32.mrb[0].mxu0
        %v844 = vadd.f32 %v669, %v843
        %v845 = vpop.f32.mrb[0].mxu0
        %846 = vmatprep.mubr.f32.mxu0 0.0
        %847 = vmatmul.mubr.f32.gmra.mrb[0].mxu0 %v694
        %v848 = vpop.f32.mrb[0].mxu0
        %v849 = vadd.f32 %v669, %v848
        %v850 = vpop.f32.mrb[0].mxu0
        %851 = vmatprep.mubr.f32.mxu0 0.0
        %852 = vmatmul.mubr.f32.gmra.mrb[0].mxu0 %v697
        %v853 = vpop.f32.mrb[0].mxu0
        %v854 = vadd.f32 %v669, %v853
        %v855 = vpop.f32.mrb[0].mxu0
        %856 = vmatprep.mubr.f32.mxu0 0.0
        %857 = vmatmul.mubr.f32.gmra.mrb[0].mxu0 %v700
        %v858 = vpop.f32.mrb[0].mxu0
        %v859 = vadd.f32 %v669, %v858
        %v860 = vpop.f32.mrb[0].mxu0
        %861 = vmatprep.mubr.f32.mxu0 0.0
        %862 = vmatmul.mubr.f32.gmra.mrb[0].mxu0 %v703
        %v863 = vpop.f32.mrb[0].mxu0
        %v864 = vadd.f32 %v669, %v863
        %v865 = vpop.f32.mrb[0].mxu0
        %866 = vmatprep.mubr.f32.mxu0 0.0
        %867 = vmatmul.mubr.f32.gmra.mrb[0].mxu0 %v706
        %v868 = vpop.f32.mrb[0].mxu0
        %v869 = vadd.f32 %v669, %v868
        %v870 = vpop.f32.mrb[0].mxu0
        %871 = vmatprep.mubr.f32.mxu0 0.0
        %872 = vmatmul.mubr.f32.gmra.mrb[0].mxu0 %v709
        %v873 = vpop.f32.mrb[0].mxu0
        %v874 = vadd.f32 %v669, %v873
        %v875 = vpop.f32.mrb[0].mxu0
        %876 = vmatprep.mubr.f32.mxu0 0.0
        %877 = vmatmul.mubr.f32.gmra.mrb[0].mxu0 %v712
        %v878 = vpop.f32.mrb[0].mxu0
        %v879 = vadd.f32 %v669, %v878
        %v880 = vpop.f32.mrb[0].mxu0
        %881 = vmatprep.mubr.f32.mxu0 0.0
        %882 = vmatmul.mubr.f32.gmra.mrb[0].mxu0 %v715
        %v883 = vpop.f32.mrb[0].mxu0
        %v884 = vadd.f32 %v669, %v883
        %v885 = vpop.f32.mrb[0].mxu0
        %886 = vmatprep.mubr.f32.mxu0 0.0
        %887 = vmatmul.mubr.f32.gmra.mrb[0].mxu0 %v718
        %v888 = vpop.f32.mrb[0].mxu0
        %v889 = vadd.f32 %v669, %v888
        %v890 = vpop.f32.mrb[0].mxu0
        %891 = vmatprep.mubr.f32.mxu0 0.0
        %892 = vmatmul.mubr.f32.gmra.mrb[0].mxu0 %v721
        %v893 = vpop.f32.mrb[0].mxu0
        %v894 = vadd.f32 %v669, %v893
        %v895 = vpop.f32.mrb[0].mxu0
        %896 = vmatprep.mubr.f32.mxu0 0.0
        %897 = vmatmul.mubr.f32.gmra.mrb[0].mxu0 %v724
        %v898 = vpop.f32.mrb[0].mxu0
        %v899 = vadd.f32 %v669, %v898
        %v900 = vpop.f32.mrb[0].mxu0
        %901 = vmatprep.mubr.f32.mxu0 0.0
        %902 = vmatmul.mubr.f32.gmra.mrb[0].mxu0 %v727
        %v903 = vpop.f32.mrb[0].mxu0
        %v904 = vadd.f32 %v669, %v903
        %v905 = vpop.f32.mrb[0].mxu0
        %906 = vmatprep.mubr.f32.mxu0 0.0
        %907 = vmatmul.mubr.f32.gmra.mrb[0].mxu0 %v730
        %v908 = vpop.f32.mrb[0].mxu0
        %v909 = vadd.f32 %v669, %v908
        %v910 = vpop.f32.mrb[0].mxu0
        %911 = vmatprep.mubr.f32.mxu0 0.0
        %912 = vmatmul.mubr.f32.gmra.mrb[0].mxu0 %v733
        %v913 = vpop.f32.mrb[0].mxu0
        %v914 = vadd.f32 %v669, %v913
        %v915 = vpop.f32.mrb[0].mxu0
        %916 = vmatprep.mubr.f32.mxu0 0.0
        %917 = vmatmul.mubr.f32.gmra.mrb[0].mxu0 %v736
        %v918 = vpop.f32.mrb[0].mxu0
        %v919 = vadd.f32 %v669, %v918
        %v920 = vpop.f32.mrb[0].mxu0
        %921 = vmatprep.mubr.f32.mxu0 0.0
        %922 = vmatmul.mubr.f32.gmra.mrb[0].mxu0 %v739
        %v923 = vpop.f32.mrb[0].mxu0
        %v924 = vadd.f32 %v669, %v923
        %v925 = vpop.f32.mrb[0].mxu0
        %926 = vmatprep.mubr.f32.mxu0 0.0
        %927 = vmatmul.mubr.f32.gmra.mrb[0].mxu0 %v742
        %v928 = vpop.f32.mrb[0].mxu0
        %v929 = vadd.f32 %v669, %v928
        %v930 = vpop.f32.mrb[0].mxu0
        %931 = vmatprep.mubr.f32.mxu0 0.0
        %932 = vmatmul.mubr.f32.gmra.mrb[0].mxu0 %v745
        %v933 = vpop.f32.mrb[0].mxu0
        %v934 = vadd.f32 %v669, %v933
        %v935 = vpop.f32.mrb[0].mxu0
        %936 = vdwg.mxu0
        %937 = vst [vmem:[%s297] sm:$0xff] %v814
        %938 = vst [vmem:[%s297 + $0x8] sm:$0xff] %v819
        %939 = vst [vmem:[%s297 + $0x10] sm:$0xff] %v824
        %940 = vst [vmem:[%s297 + $0x18] sm:$0xff] %v829
        %941 = vst [vmem:[%s297 + $0x20] sm:$0xff] %v834
        %942 = vst [vmem:[%s297 + $0x28] sm:$0xff] %v839
        %943 = vst [vmem:[%s297 + $0x30] sm:$0xff] %v844
        %944 = vst [vmem:[%s297 + $0x38] sm:$0xff] %v849
        %945 = vst [vmem:[%s297 + $0x40] sm:$0xff] %v854
        %946 = vst [vmem:[%s297 + $0x48] sm:$0xff] %v859
        %947 = vst [vmem:[%s297 + $0x50] sm:$0xff] %v864
        %948 = vst [vmem:[%s297 + $0x58] sm:$0xff] %v869
        %949 = vst [vmem:[%s297 + $0x60] sm:$0xff] %v874
        %950 = vst [vmem:[%s297 + $0x68] sm:$0xff] %v879
        %951 = vst [vmem:[%s297 + $0x70] sm:$0xff] %v884
        %952 = vst [vmem:[%s297 + $0x78] sm:$0xff] %v889
        %953 = vst [vmem:[%s297 + $0x80] sm:$0xff] %v894
        %954 = vst [vmem:[%s297 + $0x88] sm:$0xff] %v899
        %955 = vst [vmem:[%s297 + $0x90] sm:$0xff] %v904
        %956 = vst [vmem:[%s297 + $0x98] sm:$0xff] %v909
        %957 = vst [vmem:[%s297 + $0xa0] sm:$0xff] %v914
        %958 = vst [vmem:[%s297 + $0xa8] sm:$0xff] %v919
        %959 = vst [vmem:[%s297 + $0xb0] sm:$0xff] %v924
        %960 = vst [vmem:[%s297 + $0xb8] sm:$0xff] %v929
        %961 = vst [vmem:[%s297 + $0xc0] sm:$0xff] %v934
        %s962 = sand.u32 %s172, 1
        %s963 = scalar_lea.sflag [#allocation5], %s962
        %s964 = sand.u32 %s172, 1
        %s965 = smul.addr %s964, 200
        %s966 = scalar_lea.vmem [#allocation4], %s965
        // Predicated region
        $region41: #{_fused_mlp_heads.1} parent=39 // pred_check
          %p967 = pneg %p182
        $region42: #{_fused_mlp_heads.1} parent=39 // pred_check_branch
          %969 = sbr.rel (%p967) target = $region44
        $region43: #{_fused_mlp_heads.1} parent=39 // pred_region
          %s970 = smul.u32 25, %s26
          %s972 = ssub.s32 3200, 3200
          %973 = vsyncadd %s963, %s972
          %s974 = smul.addr %s970, 128
          %s975 = scalar_lea.hbm %s6, %s974
          %s976 = sshll.u32 %s966, 4
          %s977 = int_to_ptr.vmem [resolvable:$true] %s976
          %982 = dma.vmem_to_hbm [thread:$0]  %s977, 3200, %s975, %s963, 128, 128, 8
        $region44: #{_fused_mlp_heads.1} parent=39 // pred_fallthru
          _
      $region40: #{_fused_mlp_heads.1} parent=5 // pred_fallthru
        _
      %p983 = scmp.le.s32.totalorder 2, %s21
      // Predicated region
      $region45: #{_fused_mlp_heads.1} parent=5 // pred_check
        %p984 = pneg %p983
      $region46: #{_fused_mlp_heads.1} parent=5 // pred_check_branch
        %986 = sbr.rel (%p984) target = $region48
      $region47: #{_fused_mlp_heads.1} parent=5 // pred_region
        %s987 = ssub.s32 %s21, 2
        // Predicated region
        $region49: #{_fused_mlp_heads.1} parent=47 // pred_check
          %p988 = pneg %p188
        $region50: #{_fused_mlp_heads.1} parent=47 // pred_check_branch
          %990 = sbr.rel (%p988) target = $region52
        $region51: #{_fused_mlp_heads.1} parent=47 // pred_region
          %s991 = sand.u32 %s173, 1
          %s992 = scalar_lea.sflag [#allocation5], %s991
          %s993 = sand.u32 %s173, 1
          %s994 = smul.addr %s993, 200
          %s995 = scalar_lea.vmem [#allocation4], %s994
          %996 = dma.done %s992, 3200
        $region52: #{_fused_mlp_heads.1} parent=47 // pred_fallthru
          _
      $region48: #{_fused_mlp_heads.1} parent=5 // pred_fallthru
        _
    $region6: #{_fused_mlp_heads.1} parent=1 // loop_footer
      %s25 = sadd.s32 1, %s21
    $region7: #{_fused_mlp_heads.1} parent=1 // loop_footer_branch
      %20 = sbr.rel target = $region3
    $region8: #{_fused_mlp_heads.1} parent=1 // loop_exit
      _
    %997 = vsyncpa [#allocation5], 1
    %s998 = scalar_lea.sflag [#allocation5], 1
    %999 = vsyncpa %s998, 1

</llo_original>
